<compile_context>
chip_gen: v7x
topology: tpu7x:2x2x1
jax: 0.10.0
libtpu: 0.0.40
codegen_flags: <defaults>
</compile_context>

<pallas_src>
import jax
import jax.numpy as jnp
from jax.experimental import pallas as pl
from jax.experimental.pallas import tpu as pltpu

D = 768                 # hidden dim, fixed by the module (nn.Linear(768, ...))
NUMCLASS = 128          # numclass (constructor arg; chosen lane-friendly: multiple of 128)
CLASS_PER_TASK = 32     # args.class_per_task
REPEAT = NUMCLASS // CLASS_PER_TASK

assert NUMCLASS % CLASS_PER_TASK == 0, "head fusion requires numclass % class_per_task == 0"
assert NUMCLASS % 128 == 0, "numclass not a multiple of 128 -> masked (slower) output stores"


def _round_up(x, m):
    return ((x + m - 1) // m) * m


def fuse_head_params(w_fc, b_fc, w_cfc, b_cfc, dtype=jnp.bfloat16):
    """Fold fc + column-tiled client_fc into one (D, NUMCLASS) head.

    Exact up to f32 summation order.  Hoisted out of the per-forward path:
    call once per weight update and cache the result.
    """
    w_comb = (w_fc + jnp.tile(w_cfc, (1, REPEAT))).astype(dtype)   # (D, NUMCLASS)
    b_comb = (b_fc + jnp.tile(b_cfc, (1, REPEAT))).astype(dtype)   # (1, NUMCLASS)
    return w_comb, b_comb


def cfed_head_kernel(f_ref, w_ref, b_ref, o_ref):
    """Fused head on the CLS token: one lane-dense (tb,768)x(768,128) MXU matmul + bias."""
    f = f_ref[...].astype(jnp.bfloat16)                     # bf16 x bf16 -> f32 acc on MXU
    o_ref[...] = (
        jnp.dot(f, w_ref[...], preferred_element_type=jnp.float32)
        + b_ref[...].astype(jnp.float32)
    )


def cfed_forward(tokens, w_comb, b_comb, *, max_tb=1024):
    """tokens: (B, S, D) output of the feature extractor; w_comb/b_comb from fuse_head_params.

    TODO(synk): the real ViT feature extractor is an injected external module; its token
    output is taken as the kernel input (the module only adds the CLS slice + linear
    heads on top of it, which is what this kernel fuses).
    """
    B, S, d = tokens.shape
    assert d == D

    # CLS-only slice in the wrapper: the kernel never touches the other S-1 tokens,
    # so HBM->VMEM traffic is B*768*4 bytes instead of S times that.
    feat = tokens[:, 0, :]                                  # (B, D) f32

    if B <= 256:
        # Single grid step; block == full array dims so no (8,128) constraint for any B.
        tb = B
    else:
        # >= 2 grid steps so the "parallel" batch axis can shard across v7x's 2 TCs;
        # tb a multiple of 8 keeps the (8,128) block constraint with a partial last block.
        tb = min(max_tb, _round_up(pl.cdiv(B, 2), 8))

    grid = (pl.cdiv(B, tb),)

    cost = pl.CostEstimate(
        flops=2 * B * D * NUMCLASS,
        transcendentals=0,
        bytes_accessed=B * D * 4 + D * NUMCLASS * 2 + NUMCLASS * 2 + B * NUMCLASS * 4,
    )

    out = pl.pallas_call(
        cfed_head_kernel,
        out_shape=jax.ShapeDtypeStruct((B, NUMCLASS), jnp.float32),
        grid_spec=pltpu.PrefetchScalarGridSpec(
            num_scalar_prefetch=0,
            grid=grid,
            in_specs=[
                pl.BlockSpec((tb, D), lambda i: (i, 0)),            # CLS features
                pl.BlockSpec((D, NUMCLASS), lambda i: (0, 0)),      # fused weight (bf16)
                pl.BlockSpec((1, NUMCLASS), lambda i: (0, 0)),      # fused bias (bf16)
            ],
            out_specs=pl.BlockSpec((tb, NUMCLASS), lambda i: (i, 0)),
        ),
        compiler_params=pltpu.CompilerParams(
            dimension_semantics=("parallel",),
        ),
        cost_estimate=cost,
    )(feat, w_comb, b_comb)

    return out


if __name__ == "__main__":
    key = jax.random.PRNGKey(0)
    kt, kw1, kb1, kw2, kb2 = jax.random.split(key, 5)

    B, S = 16, 8                                   # small batch / short token sequence
    tokens = jax.random.normal(kt, (B, S, D), jnp.float32)

    # Deterministic parameter init (PyTorch Linear-style uniform(-1/sqrt(fan_in), +)).
    bound = 1.0 / (D ** 0.5)
    w_fc  = jax.random.uniform(kw1, (D, NUMCLASS),       jnp.float32, -bound, bound)
    b_fc  = jax.random.uniform(kb1, (1, NUMCLASS),       jnp.float32, -bound, bound)
    w_cfc = jax.random.uniform(kw2, (D, CLASS_PER_TASK), jnp.float32, -bound, bound)
    b_cfc = jax.random.uniform(kb2, (1, CLASS_PER_TASK), jnp.float32, -bound, bound)

    # Fused head params formed once (hoisted out of the per-call path).
    w_comb, b_comb = fuse_head_params(w_fc, b_fc, w_cfc, b_cfc)

    out = jax.block_until_ready(cfed_forward(tokens, w_comb, b_comb))
    assert out.shape == (B, NUMCLASS)

    feat = tokens[:, 0, :]

    # (1) Matched-precision reference: same bf16 fused weights/activations, f32 accumulate.
    ref_matched = jnp.dot(
        feat.astype(jnp.bfloat16).astype(jnp.float32),
        w_comb.astype(jnp.float32),
        precision=jax.lax.Precision.HIGHEST,
    ) + b_comb.astype(jnp.float32)
    assert jnp.allclose(out, ref_matched, atol=1e-3, rtol=1e-3), "mismatch vs matched-precision reference"

    # (2) Pure-f32 unfused reference of the original PyTorch math (loose tol covers bf16 params).
    ref_f32 = feat @ w_fc + b_fc + jnp.tile(feat @ w_cfc + b_cfc, (1, REPEAT))
    assert jnp.allclose(out, ref_f32, atol=3e-2, rtol=3e-2), "mismatch vs f32 reference"

    print("KERNEL_OK")
</pallas_src>

<mosaic_0001>
module attributes {stable_mosaic.version = 11 : i64} {
  func.func @cfed_head_kernel(%arg0: i32, %arg1: memref<16x768xf32, #tpu.memory_space<vmem>>, %arg2: memref<768x128xbf16, #tpu.memory_space<vmem>>, %arg3: memref<1x128xbf16, #tpu.memory_space<vmem>>, %arg4: memref<16x128xf32, #tpu.memory_space<vmem>>) attributes {dimension_semantics = [#tpu.dimension_semantics<parallel>], iteration_bounds = array<i64: 1>, scalar_prefetch = 0 : i64, scratch_operands = 0 : i64, tpu.core_type = #tpu.core_type<tc>, window_params = [{transform_indices = @transform_0, window_bounds = array<i64: 16, 768>}, {pipeline_mode = #tpu.pipeline_mode<synchronous>, transform_indices = @transform_1, window_bounds = array<i64: 768, 128>}, {pipeline_mode = #tpu.pipeline_mode<synchronous>, transform_indices = @transform_2, window_bounds = array<i64: 1, 128>}, {transform_indices = @transform_3, window_bounds = array<i64: 16, 128>}]} {
    %c0 = arith.constant 0 : index
    %c0_0 = arith.constant 0 : index
    %0 = vector.load %arg1[%c0, %c0_0] : memref<16x768xf32, #tpu.memory_space<vmem>>, vector<16x768xf32>
    %1 = arith.truncf %0 : vector<16x768xf32> to vector<16x768xbf16>
    %c0_1 = arith.constant 0 : index
    %c0_2 = arith.constant 0 : index
    %2 = vector.load %arg2[%c0_1, %c0_2] : memref<768x128xbf16, #tpu.memory_space<vmem>>, vector<768x128xbf16>
    %cst = arith.constant dense<0.000000e+00> : vector<16x128xf32>
    %3 = tpu.matmul %1, %2, %cst {dimension_numbers = #tpu.dot_dimension_numbers<[1], [0], [0], [1], [0, 0, 1, 1], [], []>} : vector<16x768xbf16>, vector<768x128xbf16>, vector<16x128xf32> -> vector<16x128xf32>
    %c0_3 = arith.constant 0 : index
    %c0_4 = arith.constant 0 : index
    %4 = vector.load %arg3[%c0_3, %c0_4] : memref<1x128xbf16, #tpu.memory_space<vmem>>, vector<1x128xbf16>
    %5 = arith.extf %4 : vector<1x128xbf16> to vector<1x128xf32>
    %6 = vector.broadcast %5 : vector<1x128xf32> to vector<16x128xf32>
    %7 = arith.addf %3, %6 : vector<16x128xf32>
    %c0_5 = arith.constant 0 : index
    %c0_6 = arith.constant 0 : index
    %8 = vector.load %arg4[%c0_5, %c0_6] : memref<16x128xf32, #tpu.memory_space<vmem>>, vector<16x128xf32>
    tpu.vector_store %arg4[%c0_5, %c0_6], %7 {strides = array<i32>} : memref<16x128xf32, #tpu.memory_space<vmem>>, vector<16x128xf32>,
    return
  }
  func.func @transform_0(%arg0: i32) -> (i32, i32) {
    %c0_i32 = arith.constant 0 : i32
    %c0_i32_0 = arith.constant 0 : i32
    return %arg0, %c0_i32 : i32, i32
  }
  func.func @transform_1(%arg0: i32) -> (i32, i32) {
    %c0_i32 = arith.constant 0 : i32
    %c0_i32_0 = arith.constant 0 : i32
    %c0_i32_1 = arith.constant 0 : i32
    return %c0_i32, %c0_i32_0 : i32, i32
  }
  func.func @transform_2(%arg0: i32) -> (i32, i32) {
    %c0_i32 = arith.constant 0 : i32
    %c0_i32_0 = arith.constant 0 : i32
    %c0_i32_1 = arith.constant 0 : i32
    return %c0_i32, %c0_i32_0 : i32, i32
  }
  func.func @transform_3(%arg0: i32) -> (i32, i32) {
    %c0_i32 = arith.constant 0 : i32
    %c0_i32_0 = arith.constant 0 : i32
    return %arg0, %c0_i32 : i32, i32
  }
}

</mosaic_0001>

<llo_original>
// kernel: tpu_custom_call.1
$region0: #{tpu_custom_call.1}
  #allocation0 [shape = 'u32[]', space=smem, size = 0x4, offset = 0x4, fixed_abs, tag = 'smem constant byte address 0x4 - core index']
  #allocation1 [shape = 'u32[144,128]{1,0:T(1,128)}', space=vmem, size = 0x12000, scoped, tag = 'internal scratch']
  %s0 = inlined_call_operand.hbm [shape: f32[16,768], index: 0, kind: input, shape index: {}]
  %s1 = inlined_call_operand.hbm [shape: bf16[768,128], index: 1, kind: input, shape index: {}]
  %s2 = inlined_call_operand.vmem [shape: bf16[1,128], index: 2, kind: input, shape index: {}]
  %s3 = inlined_call_operand.hbm [shape: f32[16,128], index: 3, kind: output, shape index: {}]
  %s4 = sld [smem:[#allocation0]]
  $region30: #{tpu_custom_call.1} parent=0
    _
  %s6 = ssub.s32 1, %s4
  %s7 = scalar_select 0, %s6, %s4
  $region1: #{tpu_custom_call.1} parent=0
    #allocation2 [shape = 'u8[49152]{0}', space=vmem, size = 0xc000, scoped, tag = 'input window, operand 0, single buffered']
    #allocation3 [shape = 's32[1]{0}', space=sflag, size = 0x4, scoped, tag = 'scoped memory for tpu_custom_call.1']
    #allocation4 [shape = 's32[1]{0}', space=sflag, size = 0x4, scoped, tag = 'scoped memory for tpu_custom_call.1']
    #allocation5 [shape = 'u8[196608]{0}', space=vmem, size = 0x30000, scoped, tag = 'input window, operand 1, single buffered']
    #allocation6 [shape = 's32[1]{0}', space=sflag, size = 0x4, scoped, tag = 'scoped memory for tpu_custom_call.1']
    #allocation7 [shape = 'u8[8192]{0}', space=vmem, size = 0x2000, scoped, tag = 'output window, operand 0, single buffered']
    %8 = vsyncpa [#allocation3], 0
    %9 = vsyncpa [#allocation6], 0
    %10 = vsyncpa [#allocation4], 0
    // Predicated region
    $region2: #{tpu_custom_call.1} parent=1 // pred_check
      _
    $region3: #{tpu_custom_call.1} parent=1 // pred_check_branch
      %12 = sbr.rel (0) target = $region5
    $region4: #{tpu_custom_call.1} parent=1 // pred_region
      %s14 = ssub.s32 1536, 1536
      %15 = vsyncadd [#allocation3], %s14
      %s16 = sshll.u32 [#allocation2], 4
      %s17 = int_to_ptr.vmem [resolvable:$true] %s16
      %22 = dma.hbm_to_vmem [thread:$0]  %s0, 1536, %s17, [#allocation3], 768, 768, 48
    $region5: #{tpu_custom_call.1} parent=1 // pred_fallthru
      _
    // Predicated region
    $region6: #{tpu_custom_call.1} parent=1 // pred_check
      _
    $region7: #{tpu_custom_call.1} parent=1 // pred_check_branch
      %24 = sbr.rel (0) target = $region9
    $region8: #{tpu_custom_call.1} parent=1 // pred_region
      %s26 = ssub.s32 6144, 6144
      %27 = vsyncadd [#allocation6], %s26
      %s28 = sshll.u32 [#allocation5], 4
      %s29 = int_to_ptr.vmem [resolvable:$true] %s28
      %34 = dma.hbm_to_vmem [thread:$0]  %s1, 6144, %s29, [#allocation6], 64, 64, 4
    $region9: #{tpu_custom_call.1} parent=1 // pred_fallthru
      _
    // Predicated region
    $region10: #{tpu_custom_call.1} parent=1 // pred_check
      _
    $region11: #{tpu_custom_call.1} parent=1 // pred_check_branch
      %36 = sbr.rel (0) target = $region13
    $region12: #{tpu_custom_call.1} parent=1 // pred_region
      _
    $region13: #{tpu_custom_call.1} parent=1 // pred_fallthru
      _
    // Predicated region
    $region14: #{tpu_custom_call.1} parent=1 // pred_check
      _
    $region15: #{tpu_custom_call.1} parent=1 // pred_check_branch
      %38 = sbr.rel (0) target = $region17
    $region16: #{tpu_custom_call.1} parent=1 // pred_region
      %39 = dma.done [#allocation3], 1536
    $region17: #{tpu_custom_call.1} parent=1 // pred_fallthru
      _
    // Predicated region
    $region18: #{tpu_custom_call.1} parent=1 // pred_check
      _
    $region19: #{tpu_custom_call.1} parent=1 // pred_check_branch
      %41 = sbr.rel (0) target = $region21
    $region20: #{tpu_custom_call.1} parent=1 // pred_region
      %42 = dma.done [#allocation6], 6144
    $region21: #{tpu_custom_call.1} parent=1 // pred_fallthru
      _
    %v44 = vld [vmem:[#allocation2] sm:$0xff]
    %v45 = vld [vmem:[#allocation2 + $0x8] sm:$0xff]
    %v46 = vld [vmem:[#allocation2 + $0x10] sm:$0xff]
    %v47 = vld [vmem:[#allocation2 + $0x18] sm:$0xff]
    %v48 = vld [vmem:[#allocation2 + $0x20] sm:$0xff]
    %v49 = vld [vmem:[#allocation2 + $0x28] sm:$0xff]
    %v50 = vld [vmem:[#allocation2 + $0x30] sm:$0xff]
    %v51 = vld [vmem:[#allocation2 + $0x38] sm:$0xff]
    %v52 = vld [vmem:[#allocation2 + $0x40] sm:$0xff]
    %v53 = vld [vmem:[#allocation2 + $0x48] sm:$0xff]
    %v54 = vld [vmem:[#allocation2 + $0x50] sm:$0xff]
    %v55 = vld [vmem:[#allocation2 + $0x58] sm:$0xff]
    %v56 = vpack.c.bf16 %v50, %v44
    %v57 = vpack.c.bf16 %v51, %v45
    %v58 = vpack.c.bf16 %v52, %v46
    %v59 = vpack.c.bf16 %v53, %v47
    %v60 = vpack.c.bf16 %v54, %v48
    %v61 = vpack.c.bf16 %v55, %v49
    %v62 = vld [vmem:[#allocation5] sm:$0xf]
    %v63 = vld [vmem:[#allocation5 + $0x4] sm:$0xf]
    %v64 = vld [vmem:[#allocation5 + $0x8] sm:$0xf]
    %v65 = vld [vmem:[#allocation5 + $0xc] sm:$0xf]
    %v66 = vld [vmem:[#allocation5 + $0x10] sm:$0xf]
    %v67 = vld [vmem:[#allocation5 + $0x14] sm:$0xf]
    %v68 = vld [vmem:[#allocation5 + $0x18] sm:$0xf]
    %v69 = vld [vmem:[#allocation5 + $0x1c] sm:$0xf]
    %v70 = vld [vmem:[#allocation5 + $0x20] sm:$0xf]
    %v71 = vld [vmem:[#allocation5 + $0x24] sm:$0xf]
    %v72 = vld [vmem:[#allocation5 + $0x28] sm:$0xf]
    %v73 = vld [vmem:[#allocation5 + $0x2c] sm:$0xf]
    %v74 = vld [vmem:[#allocation5 + $0x30] sm:$0xf]
    %v75 = vld [vmem:[#allocation5 + $0x34] sm:$0xf]
    %v76 = vld [vmem:[#allocation5 + $0x38] sm:$0xf]
    %v77 = vld [vmem:[#allocation5 + $0x3c] sm:$0xf]
    %v78 = vld [vmem:[#allocation5 + $0x40] sm:$0xf]
    %v79 = vld [vmem:[#allocation5 + $0x44] sm:$0xf]
    %v80 = vld [vmem:[#allocation5 + $0x48] sm:$0xf]
    %v81 = vld [vmem:[#allocation5 + $0x4c] sm:$0xf]
    %v82 = vld [vmem:[#allocation5 + $0x50] sm:$0xf]
    %v83 = vld [vmem:[#allocation5 + $0x54] sm:$0xf]
    %v84 = vld [vmem:[#allocation5 + $0x58] sm:$0xf]
    %v85 = vld [vmem:[#allocation5 + $0x5c] sm:$0xf]
    %v86 = vld [vmem:[#allocation5 + $0x60] sm:$0xf]
    %v87 = vld [vmem:[#allocation5 + $0x64] sm:$0xf]
    %v88 = vld [vmem:[#allocation5 + $0x68] sm:$0xf]
    %v89 = vld [vmem:[#allocation5 + $0x6c] sm:$0xf]
    %v90 = vld [vmem:[#allocation5 + $0x70] sm:$0xf]
    %v91 = vld [vmem:[#allocation5 + $0x74] sm:$0xf]
    %v92 = vld [vmem:[#allocation5 + $0x78] sm:$0xf]
    %v93 = vld [vmem:[#allocation5 + $0x7c] sm:$0xf]
    %v94 = vld [vmem:[#allocation5 + $0x80] sm:$0xf]
    %v95 = vld [vmem:[#allocation5 + $0x84] sm:$0xf]
    %v96 = vld [vmem:[#allocation5 + $0x88] sm:$0xf]
    %v97 = vld [vmem:[#allocation5 + $0x8c] sm:$0xf]
    %v98 = vld [vmem:[#allocation5 + $0x90] sm:$0xf]
    %v99 = vld [vmem:[#allocation5 + $0x94] sm:$0xf]
    %v100 = vld [vmem:[#allocation5 + $0x98] sm:$0xf]
    %v101 = vld [vmem:[#allocation5 + $0x9c] sm:$0xf]
    %v102 = vld [vmem:[#allocation5 + $0xa0] sm:$0xf]
    %v103 = vld [vmem:[#allocation5 + $0xa4] sm:$0xf]
    %v104 = vld [vmem:[#allocation5 + $0xa8] sm:$0xf]
    %v105 = vld [vmem:[#allocation5 + $0xac] sm:$0xf]
    %v106 = vld [vmem:[#allocation5 + $0xb0] sm:$0xf]
    %v107 = vld [vmem:[#allocation5 + $0xb4] sm:$0xf]
    %v108 = vld [vmem:[#allocation5 + $0xb8] sm:$0xf]
    %v109 = vld [vmem:[#allocation5 + $0xbc] sm:$0xf]
    %v110 = vld [vmem:[#allocation5 + $0xc0] sm:$0xf]
    %v111 = vld [vmem:[#allocation5 + $0xc4] sm:$0xf]
    %v112 = vld [vmem:[#allocation5 + $0xc8] sm:$0xf]
    %v113 = vld [vmem:[#allocation5 + $0xcc] sm:$0xf]
    %v114 = vld [vmem:[#allocation5 + $0xd0] sm:$0xf]
    %v115 = vld [vmem:[#allocation5 + $0xd4] sm:$0xf]
    %v116 = vld [vmem:[#allocation5 + $0xd8] sm:$0xf]
    %v117 = vld [vmem:[#allocation5 + $0xdc] sm:$0xf]
    %v118 = vld [vmem:[#allocation5 + $0xe0] sm:$0xf]
    %v119 = vld [vmem:[#allocation5 + $0xe4] sm:$0xf]
    %v120 = vld [vmem:[#allocation5 + $0xe8] sm:$0xf]
    %v121 = vld [vmem:[#allocation5 + $0xec] sm:$0xf]
    %v122 = vld [vmem:[#allocation5 + $0xf0] sm:$0xf]
    %v123 = vld [vmem:[#allocation5 + $0xf4] sm:$0xf]
    %v124 = vld [vmem:[#allocation5 + $0xf8] sm:$0xf]
    %v125 = vld [vmem:[#allocation5 + $0xfc] sm:$0xf]
    %v126 = vld [vmem:[#allocation5 + $0x100] sm:$0xf]
    %v127 = vld [vmem:[#allocation5 + $0x104] sm:$0xf]
    %v128 = vld [vmem:[#allocation5 + $0x108] sm:$0xf]
    %v129 = vld [vmem:[#allocation5 + $0x10c] sm:$0xf]
    %v130 = vld [vmem:[#allocation5 + $0x110] sm:$0xf]
    %v131 = vld [vmem:[#allocation5 + $0x114] sm:$0xf]
    %v132 = vld [vmem:[#allocation5 + $0x118] sm:$0xf]
    %v133 = vld [vmem:[#allocation5 + $0x11c] sm:$0xf]
    %v134 = vld [vmem:[#allocation5 + $0x120] sm:$0xf]
    %v135 = vld [vmem:[#allocation5 + $0x124] sm:$0xf]
    %v136 = vld [vmem:[#allocation5 + $0x128] sm:$0xf]
    %v137 = vld [vmem:[#allocation5 + $0x12c] sm:$0xf]
    %v138 = vld [vmem:[#allocation5 + $0x130] sm:$0xf]
    %v139 = vld [vmem:[#allocation5 + $0x134] sm:$0xf]
    %v140 = vld [vmem:[#allocation5 + $0x138] sm:$0xf]
    %v141 = vld [vmem:[#allocation5 + $0x13c] sm:$0xf]
    %v142 = vld [vmem:[#allocation5 + $0x140] sm:$0xf]
    %v143 = vld [vmem:[#allocation5 + $0x144] sm:$0xf]
    %v144 = vld [vmem:[#allocation5 + $0x148] sm:$0xf]
    %v145 = vld [vmem:[#allocation5 + $0x14c] sm:$0xf]
    %v146 = vld [vmem:[#allocation5 + $0x150] sm:$0xf]
    %v147 = vld [vmem:[#allocation5 + $0x154] sm:$0xf]
    %v148 = vld [vmem:[#allocation5 + $0x158] sm:$0xf]
    %v149 = vld [vmem:[#allocation5 + $0x15c] sm:$0xf]
    %v150 = vld [vmem:[#allocation5 + $0x160] sm:$0xf]
    %v151 = vld [vmem:[#allocation5 + $0x164] sm:$0xf]
    %v152 = vld [vmem:[#allocation5 + $0x168] sm:$0xf]
    %v153 = vld [vmem:[#allocation5 + $0x16c] sm:$0xf]
    %v154 = vld [vmem:[#allocation5 + $0x170] sm:$0xf]
    %v155 = vld [vmem:[#allocation5 + $0x174] sm:$0xf]
    %v156 = vld [vmem:[#allocation5 + $0x178] sm:$0xf]
    %v157 = vld [vmem:[#allocation5 + $0x17c] sm:$0xf]
    %v158 = vld [vmem:[%s2] sm:$0x1]
    %v159 = vunpack.c.l.bf16 %v158
    %v160 = vlaneseq
    %v161 = vshrl.u32 %v160, 7
    %v162 = vsub.s32 0, %v161
    %v163 = vrot.slane %v159, %v162
    %v260 = vunpack.c.l.b16 %v62
    %v261 = vunpack.c.l.b16 %v63
    %v262 = vunpack.c.l.b16 %v64
    %v263 = vunpack.c.l.b16 %v65
    %v264 = vunpack.c.l.b16 %v66
    %v265 = vunpack.c.l.b16 %v67
    %v266 = vunpack.c.l.b16 %v68
    %v267 = vunpack.c.l.b16 %v69
    %v268 = vunpack.c.l.b16 %v70
    %v269 = vunpack.c.l.b16 %v71
    %v270 = vunpack.c.l.b16 %v72
    %v271 = vunpack.c.l.b16 %v73
    %v272 = vunpack.c.l.b16 %v74
    %v273 = vunpack.c.l.b16 %v75
    %v274 = vunpack.c.l.b16 %v76
    %v275 = vunpack.c.l.b16 %v77
    %v276 = vunpack.c.l.b16 %v78
    %v277 = vunpack.c.l.b16 %v79
    %v278 = vunpack.c.l.b16 %v80
    %v279 = vunpack.c.l.b16 %v81
    %v280 = vunpack.c.l.b16 %v82
    %v281 = vunpack.c.l.b16 %v83
    %v282 = vunpack.c.l.b16 %v84
    %v283 = vunpack.c.l.b16 %v85
    %v284 = vunpack.c.l.b16 %v86
    %v285 = vunpack.c.l.b16 %v87
    %v286 = vunpack.c.l.b16 %v88
    %v287 = vunpack.c.l.b16 %v89
    %v288 = vunpack.c.l.b16 %v90
    %v289 = vunpack.c.l.b16 %v91
    %v290 = vunpack.c.l.b16 %v92
    %v291 = vunpack.c.l.b16 %v93
    %v292 = vunpack.c.l.b16 %v94
    %v293 = vunpack.c.l.b16 %v95
    %v294 = vunpack.c.l.b16 %v96
    %v295 = vunpack.c.l.b16 %v97
    %v296 = vunpack.c.l.b16 %v98
    %v297 = vunpack.c.l.b16 %v99
    %v298 = vunpack.c.l.b16 %v100
    %v299 = vunpack.c.l.b16 %v101
    %v300 = vunpack.c.l.b16 %v102
    %v301 = vunpack.c.l.b16 %v103
    %v302 = vunpack.c.l.b16 %v104
    %v303 = vunpack.c.l.b16 %v105
    %v304 = vunpack.c.l.b16 %v106
    %v305 = vunpack.c.l.b16 %v107
    %v306 = vunpack.c.l.b16 %v108
    %v307 = vunpack.c.l.b16 %v109
    %v308 = vunpack.c.l.b16 %v110
    %v309 = vunpack.c.l.b16 %v111
    %v310 = vunpack.c.l.b16 %v112
    %v311 = vunpack.c.l.b16 %v113
    %v312 = vunpack.c.l.b16 %v114
    %v313 = vunpack.c.l.b16 %v115
    %v314 = vunpack.c.l.b16 %v116
    %v315 = vunpack.c.l.b16 %v117
    %v316 = vunpack.c.l.b16 %v118
    %v317 = vunpack.c.l.b16 %v119
    %v318 = vunpack.c.l.b16 %v120
    %v319 = vunpack.c.l.b16 %v121
    %v320 = vunpack.c.l.b16 %v122
    %v321 = vunpack.c.l.b16 %v123
    %v322 = vunpack.c.l.b16 %v124
    %v323 = vunpack.c.l.b16 %v125
    %v324 = vunpack.c.l.b16 %v126
    %v325 = vunpack.c.l.b16 %v127
    %v326 = vunpack.c.l.b16 %v128
    %v327 = vunpack.c.l.b16 %v129
    %v328 = vunpack.c.l.b16 %v130
    %v329 = vunpack.c.l.b16 %v131
    %v330 = vunpack.c.l.b16 %v132
    %v331 = vunpack.c.l.b16 %v133
    %v332 = vunpack.c.l.b16 %v134
    %v333 = vunpack.c.l.b16 %v135
    %v334 = vunpack.c.l.b16 %v136
    %v335 = vunpack.c.l.b16 %v137
    %v336 = vunpack.c.l.b16 %v138
    %v337 = vunpack.c.l.b16 %v139
    %v338 = vunpack.c.l.b16 %v140
    %v339 = vunpack.c.l.b16 %v141
    %v340 = vunpack.c.l.b16 %v142
    %v341 = vunpack.c.l.b16 %v143
    %v342 = vunpack.c.l.b16 %v144
    %v343 = vunpack.c.l.b16 %v145
    %v344 = vunpack.c.l.b16 %v146
    %v345 = vunpack.c.l.b16 %v147
    %v346 = vunpack.c.l.b16 %v148
    %v347 = vunpack.c.l.b16 %v149
    %v348 = vunpack.c.l.b16 %v150
    %v349 = vunpack.c.l.b16 %v151
    %v350 = vunpack.c.l.b16 %v152
    %v351 = vunpack.c.l.b16 %v153
    %v352 = vunpack.c.l.b16 %v154
    %v353 = vunpack.c.l.b16 %v155
    %v354 = vunpack.c.l.b16 %v156
    %v355 = vunpack.c.l.b16 %v157
    %v356 = vpack.c.b16 %v261, %v260
    %v357 = vpack.c.b16 %v263, %v262
    %v358 = vpack.c.b16 %v265, %v264
    %v359 = vpack.c.b16 %v267, %v266
    %v360 = vpack.c.b16 %v269, %v268
    %v361 = vpack.c.b16 %v271, %v270
    %v362 = vpack.c.b16 %v273, %v272
    %v363 = vpack.c.b16 %v275, %v274
    %v364 = vpack.c.b16 %v277, %v276
    %v365 = vpack.c.b16 %v279, %v278
    %v366 = vpack.c.b16 %v281, %v280
    %v367 = vpack.c.b16 %v283, %v282
    %v368 = vpack.c.b16 %v285, %v284
    %v369 = vpack.c.b16 %v287, %v286
    %v370 = vpack.c.b16 %v289, %v288
    %v371 = vpack.c.b16 %v291, %v290
    %v372 = vpack.c.b16 %v293, %v292
    %v373 = vpack.c.b16 %v295, %v294
    %v374 = vpack.c.b16 %v297, %v296
    %v375 = vpack.c.b16 %v299, %v298
    %v376 = vpack.c.b16 %v301, %v300
    %v377 = vpack.c.b16 %v303, %v302
    %v378 = vpack.c.b16 %v305, %v304
    %v379 = vpack.c.b16 %v307, %v306
    %v380 = vpack.c.b16 %v309, %v308
    %v381 = vpack.c.b16 %v311, %v310
    %v382 = vpack.c.b16 %v313, %v312
    %v383 = vpack.c.b16 %v315, %v314
    %v384 = vpack.c.b16 %v317, %v316
    %v385 = vpack.c.b16 %v319, %v318
    %v386 = vpack.c.b16 %v321, %v320
    %v387 = vpack.c.b16 %v323, %v322
    %v388 = vpack.c.b16 %v325, %v324
    %v389 = vpack.c.b16 %v327, %v326
    %v390 = vpack.c.b16 %v329, %v328
    %v391 = vpack.c.b16 %v331, %v330
    %v392 = vpack.c.b16 %v333, %v332
    %v393 = vpack.c.b16 %v335, %v334
    %v394 = vpack.c.b16 %v337, %v336
    %v395 = vpack.c.b16 %v339, %v338
    %v396 = vpack.c.b16 %v341, %v340
    %v397 = vpack.c.b16 %v343, %v342
    %v398 = vpack.c.b16 %v345, %v344
    %v399 = vpack.c.b16 %v347, %v346
    %v400 = vpack.c.b16 %v349, %v348
    %v401 = vpack.c.b16 %v351, %v350
    %v402 = vpack.c.b16 %v353, %v352
    %v403 = vpack.c.b16 %v355, %v354
    %452 = vmatprep.subr.bf16.mxu0 0
    %453 = vmatpush1.bf16.msra.mxu0 %v356
    %454 = vmatprep.subr.bf16.mxu0 0
    %455 = vmatpush1.bf16.msra.mxu0 %v357
    %456 = vmatprep.subr.bf16.mxu0 0
    %457 = vmatpush1.bf16.msra.mxu0 %v358
    %458 = vmatprep.subr.bf16.mxu0 0
    %459 = vmatpush1.bf16.msra.mxu0 %v359
    %460 = vmatprep.subr.bf16.mxu0 0
    %461 = vmatpush1.bf16.msra.mxu0 %v360
    %462 = vmatprep.subr.bf16.mxu0 0
    %463 = vmatpush1.bf16.msra.mxu0 %v361
    %464 = vmatprep.subr.bf16.mxu0 0
    %465 = vmatpush1.bf16.msra.mxu0 %v362
    %466 = vmatprep.subr.bf16.mxu0 0
    %467 = vmatpush1.bf16.msra.mxu0 %v363
    %468 = vmatprep.subr.bf16.mxu0 0
    %469 = vmatpush1.bf16.msra.mxu0 %v364
    %470 = vmatprep.subr.bf16.mxu0 0
    %471 = vmatpush1.bf16.msra.mxu0 %v365
    %472 = vmatprep.subr.bf16.mxu0 0
    %473 = vmatpush1.bf16.msra.mxu0 %v366
    %474 = vmatprep.subr.bf16.mxu0 0
    %475 = vmatpush1.bf16.msra.mxu0 %v367
    %476 = vmatprep.subr.bf16.mxu0 0
    %477 = vmatpush1.bf16.msra.mxu0 %v368
    %478 = vmatprep.subr.bf16.mxu0 0
    %479 = vmatpush1.bf16.msra.mxu0 %v369
    %480 = vmatprep.subr.bf16.mxu0 0
    %481 = vmatpush1.bf16.msra.mxu0 %v370
    %482 = vmatprep.subr.bf16.mxu0 0
    %483 = vmatpush1.bf16.msra.mxu0 %v371
    %484 = vmatprep.mubr.bf16.mxu0 %v57
    %485 = vmatmul.mubr.bf16.gmra.mrb[0].mxu0 %v56
    %v486 = vpop.f32.mrb[0].mxu0
    %v487 = vadd.f32 %v163, %v486
    %v488 = vpop.f32.mrb[0].mxu0
    %v489 = vpop.f32.mrb[0].mxu0
    %v490 = vadd.f32 %v163, %v489
    %v491 = vpop.f32.mrb[0].mxu0
    %492 = vdwg.mxu0
    %493 = vmatprep.subr.bf16.mxu0 0
    %494 = vmatpush1.bf16.msra.mxu0 %v372
    %495 = vmatprep.subr.bf16.mxu0 0
    %496 = vmatpush1.bf16.msra.mxu0 %v373
    %497 = vmatprep.subr.bf16.mxu0 0
    %498 = vmatpush1.bf16.msra.mxu0 %v374
    %499 = vmatprep.subr.bf16.mxu0 0
    %500 = vmatpush1.bf16.msra.mxu0 %v375
    %501 = vmatprep.subr.bf16.mxu0 0
    %502 = vmatpush1.bf16.msra.mxu0 %v376
    %503 = vmatprep.subr.bf16.mxu0 0
    %504 = vmatpush1.bf16.msra.mxu0 %v377
    %505 = vmatprep.subr.bf16.mxu0 0
    %506 = vmatpush1.bf16.msra.mxu0 %v378
    %507 = vmatprep.subr.bf16.mxu0 0
    %508 = vmatpush1.bf16.msra.mxu0 %v379
    %509 = vmatprep.subr.bf16.mxu0 0
    %510 = vmatpush1.bf16.msra.mxu0 %v380
    %511 = vmatprep.subr.bf16.mxu0 0
    %512 = vmatpush1.bf16.msra.mxu0 %v381
    %513 = vmatprep.subr.bf16.mxu0 0
    %514 = vmatpush1.bf16.msra.mxu0 %v382
    %515 = vmatprep.subr.bf16.mxu0 0
    %516 = vmatpush1.bf16.msra.mxu0 %v383
    %517 = vmatprep.subr.bf16.mxu0 0
    %518 = vmatpush1.bf16.msra.mxu0 %v384
    %519 = vmatprep.subr.bf16.mxu0 0
    %520 = vmatpush1.bf16.msra.mxu0 %v385
    %521 = vmatprep.subr.bf16.mxu0 0
    %522 = vmatpush1.bf16.msra.mxu0 %v386
    %523 = vmatprep.subr.bf16.mxu0 0
    %524 = vmatpush1.bf16.msra.mxu0 %v387
    %525 = vmatprep.mubr.bf16.mxu0 %v59
    %526 = vmatmul.mubr.bf16.gmra.mrb[0].mxu0 %v58
    %v527 = vpop.f32.mrb[0].mxu0
    %v528 = vadd.f32 %v487, %v527
    %v529 = vpop.f32.mrb[0].mxu0
    %v530 = vpop.f32.mrb[0].mxu0
    %v531 = vadd.f32 %v490, %v530
    %v532 = vpop.f32.mrb[0].mxu0
    %533 = vdwg.mxu0
    %534 = vmatprep.subr.bf16.mxu0 0
    %535 = vmatpush1.bf16.msra.mxu0 %v388
    %536 = vmatprep.subr.bf16.mxu0 0
    %537 = vmatpush1.bf16.msra.mxu0 %v389
    %538 = vmatprep.subr.bf16.mxu0 0
    %539 = vmatpush1.bf16.msra.mxu0 %v390
    %540 = vmatprep.subr.bf16.mxu0 0
    %541 = vmatpush1.bf16.msra.mxu0 %v391
    %542 = vmatprep.subr.bf16.mxu0 0
    %543 = vmatpush1.bf16.msra.mxu0 %v392
    %544 = vmatprep.subr.bf16.mxu0 0
    %545 = vmatpush1.bf16.msra.mxu0 %v393
    %546 = vmatprep.subr.bf16.mxu0 0
    %547 = vmatpush1.bf16.msra.mxu0 %v394
    %548 = vmatprep.subr.bf16.mxu0 0
    %549 = vmatpush1.bf16.msra.mxu0 %v395
    %550 = vmatprep.subr.bf16.mxu0 0
    %551 = vmatpush1.bf16.msra.mxu0 %v396
    %552 = vmatprep.subr.bf16.mxu0 0
    %553 = vmatpush1.bf16.msra.mxu0 %v397
    %554 = vmatprep.subr.bf16.mxu0 0
    %555 = vmatpush1.bf16.msra.mxu0 %v398
    %556 = vmatprep.subr.bf16.mxu0 0
    %557 = vmatpush1.bf16.msra.mxu0 %v399
    %558 = vmatprep.subr.bf16.mxu0 0
    %559 = vmatpush1.bf16.msra.mxu0 %v400
    %560 = vmatprep.subr.bf16.mxu0 0
    %561 = vmatpush1.bf16.msra.mxu0 %v401
    %562 = vmatprep.subr.bf16.mxu0 0
    %563 = vmatpush1.bf16.msra.mxu0 %v402
    %564 = vmatprep.subr.bf16.mxu0 0
    %565 = vmatpush1.bf16.msra.mxu0 %v403
    %566 = vmatprep.mubr.bf16.mxu0 %v61
    %567 = vmatmul.mubr.bf16.gmra.mrb[0].mxu0 %v60
    %v568 = vpop.f32.mrb[0].mxu0
    %v569 = vadd.f32 %v528, %v568
    %v570 = vpop.f32.mrb[0].mxu0
    %v571 = vpop.f32.mrb[0].mxu0
    %v572 = vadd.f32 %v531, %v571
    %v573 = vpop.f32.mrb[0].mxu0
    %574 = vdwg.mxu0
    %575 = vst [vmem:[#allocation7] sm:$0xff] %v569
    %576 = vst [vmem:[#allocation7 + $0x8] sm:$0xff] %v572
    // Predicated region
    $region22: #{tpu_custom_call.1} parent=1 // pred_check
      _
    $region23: #{tpu_custom_call.1} parent=1 // pred_check_branch
      %578 = sbr.rel (0) target = $region25
    $region24: #{tpu_custom_call.1} parent=1 // pred_region
      %s580 = ssub.s32 256, 256
      %581 = vsyncadd [#allocation4], %s580
      %s582 = sshll.u32 [#allocation7], 4
      %s583 = int_to_ptr.vmem [resolvable:$true] %s582
      %588 = dma.vmem_to_hbm [thread:$0]  %s583, 256, %s3, [#allocation4], 128, 128, 8
    $region25: #{tpu_custom_call.1} parent=1 // pred_fallthru
      _
    // Predicated region
    $region26: #{tpu_custom_call.1} parent=1 // pred_check
      _
    $region27: #{tpu_custom_call.1} parent=1 // pred_check_branch
      %590 = sbr.rel (0) target = $region29
    $region28: #{tpu_custom_call.1} parent=1 // pred_region
      %591 = dma.done [#allocation4], 256
    $region29: #{tpu_custom_call.1} parent=1 // pred_fallthru
      _
    %592 = vsyncpa [#allocation3], 1
    %593 = vsyncpa [#allocation6], 1
    %594 = vsyncpa [#allocation4], 1

</llo_original>
